<compile_context>
chip_gen: v5e
topology: v5e:2x2
jax: 0.10.0
libtpu: 0.0.40
codegen_flags: <defaults>
</compile_context>

<pallas_src>
import numpy as np
import jax
import jax.numpy as jnp
from jax import lax
from jax.experimental import pallas as pl
from jax.experimental.pallas import tpu as pltpu

BN_EPS = 1e-5
LANES = 128  # every channel dimension is padded to 128 lanes


# ----------------------------------------------------------------------------
# pltpu.roll direction probe (one trivial kernel at build time).
# We need   out[i] = z[(i + s) % R]   for a tap shift s; the sign passed to
# pltpu.roll depends on its convention, so detect it once instead of guessing.
# ----------------------------------------------------------------------------
_ROLL_SIGN = None


def _roll_sign():
    global _ROLL_SIGN
    if _ROLL_SIGN is None:
        def k(x_ref, o_ref):
            o_ref[...] = pltpu.roll(x_ref[...], 1, 0)

        x = jnp.arange(8 * 128, dtype=jnp.float32).reshape(8, 128)
        y = pl.pallas_call(k, out_shape=jax.ShapeDtypeStruct((8, 128),
                                                             jnp.float32))(x)
        # jnp.roll convention: roll(x, 1, 0)[0] == x[-1]  ->  pass shift = -s.
        _ROLL_SIGN = -1 if float(y[0, 0]) == float(x[7, 0]) else 1
    return _ROLL_SIGN


# ----------------------------------------------------------------------------
# 0/1 row-subsample selector for a stride-s spatial decimation (bf16, exact).
# ----------------------------------------------------------------------------
def _make_subsample(h, w, stride):
    ho = (h - 1) // stride + 1
    wo = (w - 1) // stride + 1
    s = np.zeros((ho * wo, h * w), np.float32)
    for oh in range(ho):
        for ow in range(wo):
            s[oh * wo + ow, (oh * stride) * w + (ow * stride)] = 1.0
    return jnp.asarray(s, jnp.bfloat16)


# ----------------------------------------------------------------------------
# Parameter packing: fold BN scale into weights, pad channels to 128 lanes,
# cast matmul operands to bf16.  Padded lanes are zero (required invariant).
# ----------------------------------------------------------------------------
def _pack_conv3x3(w, scale, bias):
    _, _, cin, cout = w.shape
    wf = w * scale.reshape(1, 1, 1, cout)                 # fold BN scale
    wt = wf.reshape(9, cin, cout)                         # tap-major (kh*3+kw)
    wp = jnp.zeros((9, LANES, LANES), jnp.float32).at[:, :cin, :cout].set(wt)
    bp = jnp.zeros((1, LANES), jnp.float32).at[0, :cout].set(bias)
    return wp.astype(jnp.bfloat16), bp


def _pack_conv1x1(w, scale, bias):
    cin, cout = w.shape[2], w.shape[3]
    wf = w[0, 0] * scale.reshape(1, cout)
    wp = jnp.zeros((LANES, LANES), jnp.float32).at[:cin, :cout].set(wf)
    bp = jnp.zeros((1, LANES), jnp.float32).at[0, :cout].set(bias)
    return wp.astype(jnp.bfloat16), bp


# ----------------------------------------------------------------------------
# Fused whole-network kernel builder
# ----------------------------------------------------------------------------
def build_fused_forward(params, n, h, w):
    num_classes = params["fc_w"].shape[1]
    roll_sign = _roll_sign()

    # Batch tile: fold several samples into the matmul M dimension.
    b_tile = 1
    for cand in range(min(n, 8), 0, -1):
        if n % cand == 0:
            b_tile = cand
            break
    num_steps = n // b_tile

    consts = []

    def add_const(arr):
        consts.append(arr)
        return len(consts) - 1

    # --- stem ---
    wp, bp = _pack_conv3x3(params["stem_w"], params["stem_scale"],
                           params["stem_bias"])
    stem = dict(w=add_const(wp), b=add_const(bp))

    # --- subsample selectors (memoized per spatial transition) ---
    sub_cache = {}

    def sub_index(hh, ww, s):
        key = (hh, ww, s)
        if key not in sub_cache:
            sub_cache[key] = add_const(_make_subsample(hh, ww, s))
        return sub_cache[key]

    # --- blocks ---
    cur_h, cur_w = h, w
    blocks = []
    for p, stride in params["blocks"]:
        oh = (cur_h - 1) // stride + 1
        ow = (cur_w - 1) // stride + 1
        w1, b1 = _pack_conv3x3(p["conv1_w"], p["bn1_scale"], p["bn1_bias"])
        w2, b2 = _pack_conv3x3(p["conv2_w"], p["bn2_scale"], p["bn2_bias"])
        entry = dict(h_in=cur_h, w_in=cur_w, h_out=oh, w_out=ow, stride=stride,
                     w1=add_const(w1), b1=add_const(b1),
                     w2=add_const(w2), b2=add_const(b2),
                     has_sc="shortcut_w" in p)
        if stride != 1:
            entry["sub"] = sub_index(cur_h, cur_w, stride)
        if entry["has_sc"]:
            ws, bs = _pack_conv1x1(p["shortcut_w"], p["shortcut_scale"],
                                   p["shortcut_bias"])
            entry["wsc"] = add_const(ws)
            entry["bsc"] = add_const(bs)
        blocks.append(entry)
        cur_h, cur_w = oh, ow

    fin_p = cur_h * cur_w   # final spatial size per sample (unpadded rows)

    # --- head ---
    fc_w = (jnp.zeros((LANES, LANES), jnp.float32)
            .at[:params["fc_w"].shape[0], :num_classes].set(params["fc_w"])
            .astype(jnp.bfloat16))
    fc_b = jnp.zeros((1, LANES), jnp.float32).at[0, :num_classes].set(params["fc_b"])
    head = dict(w=add_const(fc_w), b=add_const(fc_b))

    n_c = len(consts)

    # ---------------- kernel body ----------------
    def kernel(*refs):
        x_ref = refs[0]
        c_refs = refs[1:1 + n_c]
        o_ref = refs[1 + n_c]

        # Per-tap validity masks (rows, 1): 1 where the tap's input pixel is
        # inside the image.  Memoized per spatial size during tracing.
        mask_cache = {}

        def tap_masks(hh, ww):
            if (hh, ww) not in mask_cache:
                pp = hh * ww
                rr = b_tile * pp
                g = lax.broadcasted_iota(jnp.int32, (rr, 1), 0)
                pidx = g % pp
                oh_i = pidx // ww
                ow_i = pidx % ww
                ms = []
                for kh in range(3):
                    for kw in range(3):
                        ih = oh_i + (kh - 1)
                        iw = ow_i + (kw - 1)
                        valid = ((ih >= 0) & (ih < hh) & (iw >= 0) & (iw < ww))
                        ms.append(valid.astype(jnp.float32))
                mask_cache[(hh, ww)] = ms
            return mask_cache[(hh, ww)]

        def conv3x3_s1(a, w_i, b_i, hh, ww, relu=True, residual=None):
            # a: (b_tile*hh*ww, 128).  9 per-tap bf16 channel-mix matmuls,
            # each consumed immediately via roll (XLU) + mask (VPU) + add.
            pp = hh * ww
            rr = b_tile * pp
            masks = tap_masks(hh, ww)
            a16 = a.astype(jnp.bfloat16)
            w_ref = c_refs[w_i]
            y = jnp.zeros((rr, LANES), jnp.float32)
            for kh in range(3):
                for kw in range(3):
                    t = kh * 3 + kw
                    sh = (kh - 1) * ww + (kw - 1)
                    z = jnp.dot(a16, w_ref[t],
                                preferred_element_type=jnp.float32)
                    if sh == 0:
                        y = y + z                       # center tap, always valid
                    else:
                        z = pltpu.roll(z, (roll_sign * sh) % rr, 0)
                        y = y + z * masks[t]
            y = y + c_refs[b_i][...]
            if residual is not None:
                y = y + residual
            if relu:
                y = jnp.maximum(y, 0.0)
            return y

        def subsample(y, sub_i, p_in):
            # 0/1 bf16 row-selector per sample (stride-2 spatial decimation).
            sub = c_refs[sub_i][...]
            y16 = y.astype(jnp.bfloat16)
            parts = [jnp.dot(sub, y16[i * p_in:(i + 1) * p_in],
                             preferred_element_type=jnp.float32)
                     for i in range(b_tile)]
            return parts[0] if b_tile == 1 else jnp.concatenate(parts, axis=0)

        a = x_ref[0]                                   # (b_tile*H*W, 128) bf16
        a = conv3x3_s1(a, stem["w"], stem["b"], h, w)

        for e in blocks:
            if e["has_sc"]:
                a_sc = (subsample(a, e["sub"], e["h_in"] * e["w_in"])
                        if e["stride"] != 1 else a)
                res = (jnp.dot(a_sc.astype(jnp.bfloat16), c_refs[e["wsc"]][...],
                               preferred_element_type=jnp.float32)
                       + c_refs[e["bsc"]][...])
            else:
                res = a
            y = conv3x3_s1(a, e["w1"], e["b1"], e["h_in"], e["w_in"], relu=True)
            if e["stride"] != 1:
                y = subsample(y, e["sub"], e["h_in"] * e["w_in"])
            a = conv3x3_s1(y, e["w2"], e["b2"], e["h_out"], e["w_out"],
                           relu=True, residual=res)

        # Head: exact per-sample spatial mean (fin_p unpadded rows), then FC.
        pooled = jnp.concatenate(
            [jnp.mean(a[i * fin_p:(i + 1) * fin_p], axis=0, keepdims=True)
             for i in range(b_tile)], axis=0)                    # (b_tile, 128)
        logits = (jnp.dot(pooled.astype(jnp.bfloat16), c_refs[head["w"]][...],
                          preferred_element_type=jnp.float32)
                  + c_refs[head["b"]][...])
        o_ref[0] = logits.astype(o_ref.dtype)

    # ---------------- specs ----------------
    def _cmap2(g):
        return (0, 0)

    def _cmap3(g):
        return (0, 0, 0)

    def const_spec(arr):
        return pl.BlockSpec(arr.shape, _cmap2 if arr.ndim == 2 else _cmap3)

    fwd = pl.pallas_call(
        kernel,
        out_shape=jax.ShapeDtypeStruct((num_steps, b_tile, LANES), jnp.float32),
        grid=(num_steps,),
        in_specs=([pl.BlockSpec((1, b_tile * h * w, LANES), lambda g: (g, 0, 0))]
                  + [const_spec(arr) for arr in consts]),
        out_specs=pl.BlockSpec((1, b_tile, LANES), lambda g: (g, 0, 0)),
        compiler_params=pltpu.CompilerParams(
            dimension_semantics=("parallel",),
            vmem_limit_bytes=32 * 1024 * 1024),   # fits v7x's 64 MiB per-core VMEM
    )

    def run(x_steps):
        out = fwd(x_steps, *consts)
        return out.reshape(n, LANES)[:, :num_classes]

    return run, b_tile


def resnet_forward(x_nchw, params):
    n, c, h, w = x_nchw.shape
    run, b_tile = build_fused_forward(params, n, h, w)
    # layout plumbing only: NCHW -> (N, H*W, 128) lane-padded bf16 slab.
    x_nhwc = jnp.transpose(x_nchw, (0, 2, 3, 1)).reshape(n, h * w, c)
    x_lanes = (jnp.zeros((n, h * w, LANES), jnp.bfloat16)
               .at[:, :, :c].set(x_nhwc.astype(jnp.bfloat16)))
    x_steps = x_lanes.reshape(n // b_tile, b_tile * h * w, LANES)
    return run(x_steps)


# ----------------------------------------------------------------------------
# Deterministic parameter initialization (eval-mode BN folded to scale/bias)
# ----------------------------------------------------------------------------
def _fold_bn(key, c):
    k1, k2, k3, k4 = jax.random.split(key, 4)
    gamma = 1.0 + 0.1 * jax.random.normal(k1, (c,), jnp.float32)
    beta = 0.1 * jax.random.normal(k2, (c,), jnp.float32)
    mean = 0.1 * jax.random.normal(k3, (c,), jnp.float32)
    var = 0.5 + jnp.abs(jax.random.normal(k4, (c,), jnp.float32))
    scale = gamma / jnp.sqrt(var + BN_EPS)
    bias = beta - mean * scale
    return scale, bias


def _conv_w(key, kh, kw, cin, cout):
    fan_in = kh * kw * cin
    return (jax.random.normal(key, (kh, kw, cin, cout), jnp.float32)
            * (2.0 / fan_in) ** 0.5)


def init_params(key, num_blocks=(1, 1, 1), num_classes=10):
    keys = iter(jax.random.split(key, 128))
    params = {}
    params["stem_w"] = _conv_w(next(keys), 3, 3, 3, 16)
    params["stem_scale"], params["stem_bias"] = _fold_bn(next(keys), 16)

    blocks = []
    in_c = 16
    for stage_c, n_blocks, stage_stride in zip((16, 32, 64), num_blocks, (1, 2, 2)):
        for b in range(n_blocks):
            stride = stage_stride if b == 0 else 1
            p = {}
            p["conv1_w"] = _conv_w(next(keys), 3, 3, in_c, stage_c)
            p["bn1_scale"], p["bn1_bias"] = _fold_bn(next(keys), stage_c)
            p["conv2_w"] = _conv_w(next(keys), 3, 3, stage_c, stage_c)
            p["bn2_scale"], p["bn2_bias"] = _fold_bn(next(keys), stage_c)
            if in_c != stage_c or stride != 1:
                p["shortcut_w"] = _conv_w(next(keys), 1, 1, in_c, stage_c)
                p["shortcut_scale"], p["shortcut_bias"] = _fold_bn(next(keys), stage_c)
            blocks.append((p, stride))
            in_c = stage_c
    params["blocks"] = blocks

    params["fc_w"] = (jax.random.normal(next(keys), (64, num_classes), jnp.float32)
                      * (1.0 / 64) ** 0.5)
    params["fc_b"] = 0.01 * jax.random.normal(next(keys), (num_classes,), jnp.float32)
    return params


# ----------------------------------------------------------------------------
# Pure-JAX f32 reference (lax.conv) for the correctness check
# ----------------------------------------------------------------------------
def _ref_conv_bn(x, w, scale, bias, stride, pad, relu, residual=None):
    y = lax.conv_general_dilated(
        x, w, window_strides=(stride, stride),
        padding=((pad, pad), (pad, pad)),
        dimension_numbers=("NHWC", "HWIO", "NHWC"),
    )
    y = y * scale.reshape(1, 1, 1, -1) + bias.reshape(1, 1, 1, -1)
    if residual is not None:
        y = y + residual
    if relu:
        y = jnp.maximum(y, 0.0)
    return y


def _ref_forward(x_nchw, params):
    x = jnp.transpose(x_nchw, (0, 2, 3, 1))
    x = _ref_conv_bn(x, params["stem_w"], params["stem_scale"], params["stem_bias"],
                     1, 1, True)
    for p, stride in params["blocks"]:
        if "shortcut_w" in p:
            residual = _ref_conv_bn(x, p["shortcut_w"], p["shortcut_scale"],
                                    p["shortcut_bias"], stride, 0, False)
        else:
            residual = x
        hmid = _ref_conv_bn(x, p["conv1_w"], p["bn1_scale"], p["bn1_bias"],
                            stride, 1, True)
        x = _ref_conv_bn(hmid, p["conv2_w"], p["bn2_scale"], p["bn2_bias"],
                         1, 1, True, residual=residual)
    pooled = jnp.mean(x, axis=(1, 2))
    return pooled @ params["fc_w"] + params["fc_b"]


# ----------------------------------------------------------------------------
if __name__ == "__main__":
    key = jax.random.PRNGKey(0)
    k_x, k_p = jax.random.split(key)
    # CIFAR-like input: batch=2, 3 channels, 16x16 spatial (NCHW)
    x = jax.random.normal(k_x, (2, 3, 16, 16), jnp.float32)
    params = init_params(k_p, num_blocks=(1, 1, 1), num_classes=10)

    out = jax.block_until_ready(resnet_forward(x, params))
    assert out.shape == (2, 10), out.shape

    ref = jax.block_until_ready(_ref_forward(x, params))
    max_err = float(jnp.max(jnp.abs(out - ref)))
    # All matmul operands are bf16 (f32 accumulation) -> tolerance is relaxed
    # versus the pure-f32 lax.conv reference.
    assert max_err < 1e-1, f"mismatch vs f32 reference: {max_err}"

    print("KERNEL_OK")
</pallas_src>

<mosaic_0001>
module attributes {stable_mosaic.version = 11 : i64} {
  func.func @k(%arg0: memref<8x128xf32, #tpu.memory_space<vmem>>, %arg1: memref<8x128xf32, #tpu.memory_space<vmem>>) attributes {dimension_semantics = [], scalar_prefetch = 0 : i64, scratch_operands = 0 : i64, tpu.core_type = #tpu.core_type<tc>} {
    %c0 = arith.constant 0 : index
    %c0_0 = arith.constant 0 : index
    %0 = vector.load %arg0[%c0, %c0_0] : memref<8x128xf32, #tpu.memory_space<vmem>>, vector<8x128xf32>
    %c1_i32 = arith.constant 1 : i32
    %1 = tpu.dynamic_rotate %0 by %c1_i32 dim 0 : vector<8x128xf32>, i32 -> vector<8x128xf32>
    %c0_1 = arith.constant 0 : index
    %c0_2 = arith.constant 0 : index
    %2 = vector.load %arg1[%c0_1, %c0_2] : memref<8x128xf32, #tpu.memory_space<vmem>>, vector<8x128xf32>
    tpu.vector_store %arg1[%c0_1, %c0_2], %1 {strides = array<i32>} : memref<8x128xf32, #tpu.memory_space<vmem>>, vector<8x128xf32>,
    return
  }
}

</mosaic_0001>

<llo_original>
// kernel: tpu_custom_call.1
$region0: #{tpu_custom_call.1}
  #allocation0 [shape = 'u32[]', space=smem, size = 0x4, offset = 0x4, fixed_abs, tag = 'smem constant byte address 0x4 - core index']
  #allocation1 [shape = 'u32[72,128]{1,0:T(1,128)}', space=vmem, size = 0x9000, scoped, tag = 'internal scratch']
  %s0 = inlined_call_operand.hbm [shape: f32[8,128], index: 0, kind: input, shape index: {}]
  %s1 = inlined_call_operand.hbm [shape: f32[8,128], index: 1, kind: output, shape index: {}]
  %s2 = sld [smem:[#allocation0]]
  $region18: #{tpu_custom_call.1} parent=0
    _
  %s4 = ssub.s32 1, %s2
  %s5 = scalar_select 0, %s4, %s2
  $region1: #{tpu_custom_call.1} parent=0
    #allocation2 [shape = 'u8[4096]{0}', space=vmem, size = 0x1000, scoped, tag = 'input window, operand 0, single buffered']
    #allocation3 [shape = 's32[1]{0}', space=sflag, size = 0x4, scoped, tag = 'scoped memory for tpu_custom_call.1']
    #allocation4 [shape = 's32[1]{0}', space=sflag, size = 0x4, scoped, tag = 'scoped memory for tpu_custom_call.1']
    #allocation5 [shape = 'u8[4096]{0}', space=vmem, size = 0x1000, scoped, tag = 'output window, operand 0, single buffered']
    %6 = vsyncpa [#allocation3], 0
    %7 = vsyncpa [#allocation4], 0
    // Predicated region
    $region2: #{tpu_custom_call.1} parent=1 // pred_check
      _
    $region3: #{tpu_custom_call.1} parent=1 // pred_check_branch
      %9 = sbr.rel (0) target = $region5
    $region4: #{tpu_custom_call.1} parent=1 // pred_region
      %11 = vsyncadd [#allocation3], 0
      %s13 = sshll.u32 %s0, 4
      %s14 = int_to_ptr.hbm [resolvable:$true] %s13
      %s15 = sshll.u32 [#allocation2], 4
      %s16 = int_to_ptr.vmem [resolvable:$true] %s15
      %18 = dma.hbm_to_vmem [thread:$0]  %s14, 128, %s16, [#allocation3]
    $region5: #{tpu_custom_call.1} parent=1 // pred_fallthru
      _
    // Predicated region
    $region6: #{tpu_custom_call.1} parent=1 // pred_check
      _
    $region7: #{tpu_custom_call.1} parent=1 // pred_check_branch
      %20 = sbr.rel (0) target = $region9
    $region8: #{tpu_custom_call.1} parent=1 // pred_region
      %22 = dma.done [#allocation3], 128
    $region9: #{tpu_custom_call.1} parent=1 // pred_fallthru
      _
    %v23 = vld [vmem:[#allocation2] sm:$0xff]
    %v24 = vrot.slane %v23, 7
    %25 = vst [vmem:[#allocation5] sm:$0xff] %v24
    // Predicated region
    $region10: #{tpu_custom_call.1} parent=1 // pred_check
      _
    $region11: #{tpu_custom_call.1} parent=1 // pred_check_branch
      %27 = sbr.rel (0) target = $region13
    $region12: #{tpu_custom_call.1} parent=1 // pred_region
      %29 = vsyncadd [#allocation4], 0
      %s31 = sshll.u32 [#allocation5], 4
      %s32 = int_to_ptr.vmem [resolvable:$true] %s31
      %s33 = sshll.u32 %s1, 4
      %s34 = int_to_ptr.hbm [resolvable:$true] %s33
      %36 = dma.vmem_to_hbm [thread:$0]  %s32, 128, %s34, [#allocation4]
    $region13: #{tpu_custom_call.1} parent=1 // pred_fallthru
      _
    // Predicated region
    $region14: #{tpu_custom_call.1} parent=1 // pred_check
      _
    $region15: #{tpu_custom_call.1} parent=1 // pred_check_branch
      %38 = sbr.rel (0) target = $region17
    $region16: #{tpu_custom_call.1} parent=1 // pred_region
      %40 = dma.done [#allocation4], 128
    $region17: #{tpu_custom_call.1} parent=1 // pred_fallthru
      _
    %41 = vsyncpa [#allocation3], 1
    %42 = vsyncpa [#allocation4], 1

</llo_original>
